<compile_context>
chip_gen: v6e
topology: v6e:2x2x1
jax: 0.10.0
libtpu: 0.0.40
codegen_flags: <defaults>
</compile_context>

<pallas_src>
import functools
import math

import jax
import jax.numpy as jnp
from jax import lax
from jax.experimental import pallas as pl
from jax.experimental.pallas import tpu as pltpu


def _flash_attention_kernel(q_ref, k_ref, v_ref, o_ref,
                            q_scr, m_scr, l_scr, acc_scr,
                            *, scale, compute_dtype):
    """One (Bb, tq, tk) tile of softmax(QK^T/sqrt(d)) @ V with online softmax."""
    ki = pl.program_id(2)

    @pl.when(ki == 0)
    def _init():
        # Q block is resident across the whole ki axis (its index_map ignores
        # ki, so the DMA is skipped); scale + cast it exactly once per tile.
        q_scr[...] = (q_ref[...].astype(jnp.float32) * scale).astype(compute_dtype)
        m_scr[...] = jnp.full(m_scr.shape, -jnp.inf, dtype=m_scr.dtype)
        l_scr[...] = jnp.zeros(l_scr.shape, dtype=l_scr.dtype)
        acc_scr[...] = jnp.zeros(acc_scr.shape, dtype=acc_scr.dtype)

    k = k_ref[...].astype(compute_dtype)                     # (Bb, tk, D)

    # Scores: batched contraction directly on D (no explicit k.T / relayout).
    s = lax.dot_general(
        q_scr[...], k,
        dimension_numbers=(((2,), (2,)), ((0,), (0,))),
        preferred_element_type=jnp.float32,
    )                                                        # (Bb, tq, tk) f32

    m_prev = m_scr[...]                                      # (Bb, tq, 1)
    m_new = jnp.maximum(m_prev, jnp.max(s, axis=-1, keepdims=True))
    alpha = jnp.exp(m_prev - m_new)                          # rescale old stats
    p = jnp.exp(s - m_new)                                   # un-normalized probs

    l_scr[...] = alpha * l_scr[...] + jnp.sum(p, axis=-1, keepdims=True)

    pv = lax.dot_general(
        p.astype(compute_dtype), v_ref[...].astype(compute_dtype),
        dimension_numbers=(((2,), (1,)), ((0,), (0,))),
        preferred_element_type=jnp.float32,
    )                                                        # (Bb, tq, D) f32
    acc_scr[...] = alpha * acc_scr[...] + pv
    m_scr[...] = m_new

    @pl.when(ki == pl.num_programs(2) - 1)
    def _finalize():
        # Runs once per (bi, qi) tile -> exact reciprocal is essentially free.
        inv_l = pl.reciprocal(l_scr[...], approx=False)
        o_ref[...] = (acc_scr[...] * inv_l).astype(o_ref.dtype)


def _generation_defaults():
    """(tq_target, tk_target, vmem_limit_bytes) chosen from the core's VMEM size."""
    vmem_bytes = 64 * 1024 * 1024
    try:
        vmem_bytes = int(pltpu.get_tpu_info().vmem_capacity_bytes)
    except Exception:
        pass
    if vmem_bytes >= 96 * 1024 * 1024:
        # v5e / v6e class (128 MiB VMEM per core): large q tiles cut the number
        # of full K/V re-streams; scoped limit raised above the 16/32 MiB default.
        return 512, 1024, 64 * 1024 * 1024
    # v7x class (64 MiB VMEM per core, 2 TensorCores): ~46 MiB scoped limit
    # (leave ~16 MiB physical headroom); spend the extra VMEM on tk, not bb.
    return 256, 1024, 46 * 1024 * 1024


def _sublane_multiple(dtype):
    """Second-to-last-dim tiling multiple for a given element type."""
    return max(8, 32 // jnp.dtype(dtype).itemsize)   # f32->8, bf16->16, int8/fp8->32


def _pick_block(n, target, multiple):
    """Largest divisor of n that is <= target and a multiple of `multiple`
    (falls back to the full extent n, which is always a legal block size)."""
    if n <= target:
        return n
    best = None
    d = multiple
    while d <= target:
        if n % d == 0:
            best = d
        d += multiple
    return best if best is not None else n


def _per_batch_vmem_bytes(tq, tk, d, in_itemsize, out_itemsize, comp_itemsize):
    """Per-batch-row, per-step VMEM footprint estimate."""
    # Double-buffered q / k / v / o blocks.
    blocks = 2 * (tq * d * in_itemsize            # q
                  + 2 * tk * d * in_itemsize      # k, v
                  + tq * d * out_itemsize)        # o
    # Persistent scratch: cached scaled Q, f32 acc, m/l (padded to 128 lanes).
    scratch = tq * d * comp_itemsize + tq * d * 4 + 2 * tq * 128 * 4
    # Per-step (tq, tk) temporaries: s (f32), p (f32), p cast to compute dtype.
    temps = tq * tk * (4 + 4 + comp_itemsize)
    return blocks + scratch + temps


def _pick_batch_block(b, q_steps, per_batch_bytes, budget_bytes, min_parallel):
    """Largest divisor of b that fits the VMEM budget and keeps at least
    `min_parallel` parallel grid steps (megacore / v7x dual-core)."""
    best = 1
    for d in range(1, b + 1):
        if b % d:
            continue
        if d * per_batch_bytes > budget_bytes:
            continue
        if d > 1 and (b // d) * q_steps < min_parallel:
            continue
        best = d
    return best


def quantum_sparse_attention(query, key, value, hidden_dim, *,
                             compute_dtype=jnp.bfloat16):
    """JAX/Pallas equivalent of QuantumSparseAttention(hidden_dim).forward.

    compute_dtype: dtype of the MXU operands (accumulation is always f32).
      bfloat16 (default) runs the MXU at native throughput and halves the
      streamed K/V bytes; pass jnp.float32 for bit-exact f32 semantics.
    """
    B, S, D = query.shape
    assert key.shape == (B, S, D) and value.shape == (B, S, D)
    out_dtype = query.dtype
    scale = 1.0 / math.sqrt(hidden_dim)

    # Lane-dense trailing dim: zero-pad D up to a multiple of 128. Zero padding
    # does not change QK^T (extra zeros on the contraction dim) and the extra
    # output columns of probs @ V_padded are zero, sliced off below.
    d_pad = max(128, 128 * pl.cdiv(D, 128))
    if d_pad != D:
        pad = ((0, 0), (0, 0), (0, d_pad - D))
        query = jnp.pad(query, pad)
        key = jnp.pad(key, pad)
        value = jnp.pad(value, pad)

    # Stream the MXU operands at compute_dtype (halves K/V DMA for bf16).
    if query.dtype != compute_dtype:
        q_in = query.astype(compute_dtype)
        k_in = key.astype(compute_dtype)
        v_in = value.astype(compute_dtype)
    else:
        q_in, k_in, v_in = query, key, value

    tq_target, tk_target, vmem_limit = _generation_defaults()
    sub_mult = _sublane_multiple(compute_dtype)
    tq = _pick_block(S, tq_target, sub_mult)
    tk = _pick_block(S, tk_target, sub_mult)

    in_item = jnp.dtype(q_in.dtype).itemsize
    out_item = jnp.dtype(out_dtype).itemsize
    comp_item = jnp.dtype(compute_dtype).itemsize

    headroom = 2 * 1024 * 1024                      # compiler internal scratch
    budget = max(vmem_limit - headroom, 4 * 1024 * 1024)

    # Shrink tiles if even a single batch row would not fit the budget.
    for _ in range(8):
        if _per_batch_vmem_bytes(tq, tk, d_pad, in_item, out_item, comp_item) <= budget:
            break
        if tk >= tq and tk > sub_mult:
            new_tk = _pick_block(S, max(tk // 2, sub_mult), sub_mult)
            if new_tk < tk:
                tk = new_tk
                continue
        if tq > sub_mult:
            new_tq = _pick_block(S, max(tq // 2, sub_mult), sub_mult)
            if new_tq < tq:
                tq = new_tq
                continue
        break

    per_batch = _per_batch_vmem_bytes(tq, tk, d_pad, in_item, out_item, comp_item)

    # bb > 1 only pays when a step is comparable to the ~0.35us pipeline
    # overhead; otherwise keep bb = 1 (smaller footprint, more parallel steps).
    SMALL_WORK = 1 << 22                            # per-step matmul volume (elems)
    if tq * tk * d_pad > SMALL_WORK:
        bb = 1
    else:
        bb = _pick_batch_block(B, S // tq, per_batch, budget, min_parallel=2)

    grid = (B // bb, S // tq, S // tk)

    kernel = functools.partial(
        _flash_attention_kernel, scale=scale, compute_dtype=compute_dtype)

    q_spec = pl.BlockSpec((bb, tq, d_pad), lambda bi, qi, ki: (bi, qi, 0))
    kv_spec = pl.BlockSpec((bb, tk, d_pad), lambda bi, qi, ki: (bi, ki, 0))
    o_spec = pl.BlockSpec((bb, tq, d_pad), lambda bi, qi, ki: (bi, qi, 0))

    out = pl.pallas_call(
        kernel,
        out_shape=jax.ShapeDtypeStruct((B, S, d_pad), out_dtype),
        grid_spec=pltpu.PrefetchScalarGridSpec(
            num_scalar_prefetch=0,
            grid=grid,
            in_specs=[q_spec, kv_spec, kv_spec],
            out_specs=o_spec,
            scratch_shapes=[
                pltpu.VMEM((bb, tq, d_pad), compute_dtype),  # cached scaled Q
                pltpu.VMEM((bb, tq, 1), jnp.float32),        # running max m
                pltpu.VMEM((bb, tq, 1), jnp.float32),        # running denom l
                pltpu.VMEM((bb, tq, d_pad), jnp.float32),    # un-normalized acc
            ],
        ),
        compiler_params=pltpu.CompilerParams(
            dimension_semantics=("parallel", "parallel", "arbitrary"),
            vmem_limit_bytes=vmem_limit,
        ),
    )(q_in, k_in, v_in)

    if d_pad != D:
        out = out[..., :D]
    return out


def _reference(query, key, value, hidden_dim):
    scores = jnp.einsum("bqd,bkd->bqk", query, key,
                        precision=lax.Precision.HIGHEST) / math.sqrt(hidden_dim)
    probs = jax.nn.softmax(scores, axis=-1)
    return jnp.einsum("bqk,bkd->bqd", probs, value,
                      precision=lax.Precision.HIGHEST)


if __name__ == "__main__":
    rng = jax.random.PRNGKey(0)

    # Primary case uses a lane-dense trailing dim (D=128); the second case checks
    # the original small hidden_dim=32 configuration (padded internally to 128).
    for (B, S, D) in ((4, 16, 128), (2, 8, 32)):
        hidden_dim = D
        kq, kk, kv, rng = jax.random.split(rng, 4)
        q = jax.random.normal(kq, (B, S, D), dtype=jnp.float32)
        k = jax.random.normal(kk, (B, S, D), dtype=jnp.float32)
        v = jax.random.normal(kv, (B, S, D), dtype=jnp.float32)

        ref = _reference(q, k, v, hidden_dim)

        # Default path: bf16 MXU operands, f32 accumulation.
        out_bf16 = jax.block_until_ready(quantum_sparse_attention(q, k, v, hidden_dim))
        assert out_bf16.shape == (B, S, D) and out_bf16.dtype == q.dtype
        assert jnp.allclose(out_bf16, ref, atol=5e-2, rtol=5e-2), (
            f"bf16-path mismatch vs reference at shape {(B, S, D)}")

        # f32 operand path: tighter check of the kernel structure itself.
        out_f32 = jax.block_until_ready(
            quantum_sparse_attention(q, k, v, hidden_dim, compute_dtype=jnp.float32))
        assert jnp.allclose(out_f32, ref, atol=5e-3, rtol=5e-3), (
            f"f32-path mismatch vs reference at shape {(B, S, D)}")

    print("KERNEL_OK")
</pallas_src>

<mosaic_0001>
module attributes {stable_mosaic.version = 11 : i64} {
  func.func @_flash_attention_kernel(%arg0: i32, %arg1: i32, %arg2: i32, %arg3: memref<2x16x128xbf16, #tpu.memory_space<vmem>>, %arg4: memref<2x16x128xbf16, #tpu.memory_space<vmem>>, %arg5: memref<2x16x128xbf16, #tpu.memory_space<vmem>>, %arg6: memref<2x16x128xf32, #tpu.memory_space<vmem>>, %arg7: memref<2x16x128xbf16, #tpu.memory_space<vmem>>, %arg8: memref<2x16x1xf32, #tpu.memory_space<vmem>>, %arg9: memref<2x16x1xf32, #tpu.memory_space<vmem>>, %arg10: memref<2x16x128xf32, #tpu.memory_space<vmem>>) attributes {dimension_semantics = [#tpu.dimension_semantics<parallel>, #tpu.dimension_semantics<parallel>, #tpu.dimension_semantics<arbitrary>], iteration_bounds = array<i64: 2, 1, 1>, scalar_prefetch = 0 : i64, scratch_operands = 4 : i64, tpu.core_type = #tpu.core_type<tc>, window_params = [{transform_indices = @transform_0, window_bounds = array<i64: 2, 16, 128>}, {transform_indices = @transform_1, window_bounds = array<i64: 2, 16, 128>}, {transform_indices = @transform_2, window_bounds = array<i64: 2, 16, 128>}, {transform_indices = @transform_3, window_bounds = array<i64: 2, 16, 128>}]} {
    %c0_i32 = arith.constant 0 : i32
    %0 = arith.cmpi eq, %arg2, %c0_i32 : i32
    %1 = arith.extui %0 : i1 to i32
    %c0_i32_0 = arith.constant 0 : i32
    %2 = arith.cmpi ne, %1, %c0_i32_0 : i32
    scf.if %2 {
      %c0_32 = arith.constant 0 : index
      %c0_33 = arith.constant 0 : index
      %c0_34 = arith.constant 0 : index
      %33 = vector.load %arg3[%c0_32, %c0_33, %c0_34] : memref<2x16x128xbf16, #tpu.memory_space<vmem>>, vector<2x16x128xbf16>
      %34 = arith.extf %33 : vector<2x16x128xbf16> to vector<2x16x128xf32>
      %cst_35 = arith.constant 0.0883883461 : f32
      %35 = vector.broadcast %cst_35 : f32 to vector<2x16x128xf32>
      %36 = arith.mulf %34, %35 : vector<2x16x128xf32>
      %37 = arith.truncf %36 : vector<2x16x128xf32> to vector<2x16x128xbf16>
      %c0_36 = arith.constant 0 : index
      %c0_37 = arith.constant 0 : index
      %c0_38 = arith.constant 0 : index
      %38 = vector.load %arg7[%c0_36, %c0_37, %c0_38] : memref<2x16x128xbf16, #tpu.memory_space<vmem>>, vector<2x16x128xbf16>
      tpu.vector_store %arg7[%c0_36, %c0_37, %c0_38], %37 {strides = array<i32>} : memref<2x16x128xbf16, #tpu.memory_space<vmem>>, vector<2x16x128xbf16>,
      %cst_39 = arith.constant 0xFF800000 : f32
      %39 = vector.broadcast %cst_39 : f32 to vector<2x16x1xf32>
      %c0_40 = arith.constant 0 : index
      %c0_41 = arith.constant 0 : index
      %c0_42 = arith.constant 0 : index
      %40 = vector.load %arg8[%c0_40, %c0_41, %c0_42] : memref<2x16x1xf32, #tpu.memory_space<vmem>>, vector<2x16x1xf32>
      tpu.vector_store %arg8[%c0_40, %c0_41, %c0_42], %39 {strides = array<i32>} : memref<2x16x1xf32, #tpu.memory_space<vmem>>, vector<2x16x1xf32>,
      %cst_43 = arith.constant 0.000000e+00 : f32
      %41 = vector.broadcast %cst_43 : f32 to vector<2x16x1xf32>
      %c0_44 = arith.constant 0 : index
      %c0_45 = arith.constant 0 : index
      %c0_46 = arith.constant 0 : index
      %42 = vector.load %arg9[%c0_44, %c0_45, %c0_46] : memref<2x16x1xf32, #tpu.memory_space<vmem>>, vector<2x16x1xf32>
      tpu.vector_store %arg9[%c0_44, %c0_45, %c0_46], %41 {strides = array<i32>} : memref<2x16x1xf32, #tpu.memory_space<vmem>>, vector<2x16x1xf32>,
      %cst_47 = arith.constant 0.000000e+00 : f32
      %43 = vector.broadcast %cst_47 : f32 to vector<2x16x128xf32>
      %c0_48 = arith.constant 0 : index
      %c0_49 = arith.constant 0 : index
      %c0_50 = arith.constant 0 : index
      %44 = vector.load %arg10[%c0_48, %c0_49, %c0_50] : memref<2x16x128xf32, #tpu.memory_space<vmem>>, vector<2x16x128xf32>
      tpu.vector_store %arg10[%c0_48, %c0_49, %c0_50], %43 {strides = array<i32>} : memref<2x16x128xf32, #tpu.memory_space<vmem>>, vector<2x16x128xf32>,
    } else {
    }
    %c0 = arith.constant 0 : index
    %c0_1 = arith.constant 0 : index
    %c0_2 = arith.constant 0 : index
    %3 = vector.load %arg4[%c0, %c0_1, %c0_2] : memref<2x16x128xbf16, #tpu.memory_space<vmem>>, vector<2x16x128xbf16>
    %c0_3 = arith.constant 0 : index
    %c0_4 = arith.constant 0 : index
    %c0_5 = arith.constant 0 : index
    %4 = vector.load %arg7[%c0_3, %c0_4, %c0_5] : memref<2x16x128xbf16, #tpu.memory_space<vmem>>, vector<2x16x128xbf16>
    %cst = arith.constant dense<0.000000e+00> : vector<2x16x16xf32>
    %5 = tpu.matmul %4, %3, %cst {dimension_numbers = #tpu.dot_dimension_numbers<[2], [2], [1], [1], [0, 0, 0, 1, 1, 1], [0], [0]>} : vector<2x16x128xbf16>, vector<2x16x128xbf16>, vector<2x16x16xf32> -> vector<2x16x16xf32>
    %c0_6 = arith.constant 0 : index
    %c0_7 = arith.constant 0 : index
    %c0_8 = arith.constant 0 : index
    %6 = vector.load %arg8[%c0_6, %c0_7, %c0_8] : memref<2x16x1xf32, #tpu.memory_space<vmem>>, vector<2x16x1xf32>
    %cst_9 = arith.constant dense<0xFF800000> : vector<2x16xf32>
    %7 = vector.multi_reduction <maximumf>, %5, %cst_9 [2] : vector<2x16x16xf32> to vector<2x16xf32>
    %8 = vector.shape_cast %7 : vector<2x16xf32> to vector<2x16x1xf32>
    %9 = arith.maximumf %6, %8 : vector<2x16x1xf32>
    %10 = arith.subf %6, %9 : vector<2x16x1xf32>
    %11 = math.exp %10 : vector<2x16x1xf32>
    %12 = vector.broadcast %9 : vector<2x16x1xf32> to vector<2x16x16xf32>
    %13 = arith.subf %5, %12 : vector<2x16x16xf32>
    %14 = math.exp %13 : vector<2x16x16xf32>
    %c0_10 = arith.constant 0 : index
    %c0_11 = arith.constant 0 : index
    %c0_12 = arith.constant 0 : index
    %15 = vector.load %arg9[%c0_10, %c0_11, %c0_12] : memref<2x16x1xf32, #tpu.memory_space<vmem>>, vector<2x16x1xf32>
    %16 = arith.mulf %11, %15 : vector<2x16x1xf32>
    %cst_13 = arith.constant dense<0.000000e+00> : vector<2x16xf32>
    %17 = vector.multi_reduction <add>, %14, %cst_13 [2] : vector<2x16x16xf32> to vector<2x16xf32>
    %18 = vector.shape_cast %17 : vector<2x16xf32> to vector<2x16x1xf32>
    %19 = arith.addf %16, %18 : vector<2x16x1xf32>
    %c0_14 = arith.constant 0 : index
    %c0_15 = arith.constant 0 : index
    %c0_16 = arith.constant 0 : index
    %20 = vector.load %arg9[%c0_14, %c0_15, %c0_16] : memref<2x16x1xf32, #tpu.memory_space<vmem>>, vector<2x16x1xf32>
    tpu.vector_store %arg9[%c0_14, %c0_15, %c0_16], %19 {strides = array<i32>} : memref<2x16x1xf32, #tpu.memory_space<vmem>>, vector<2x16x1xf32>,
    %21 = arith.truncf %14 : vector<2x16x16xf32> to vector<2x16x16xbf16>
    %c0_17 = arith.constant 0 : index
    %c0_18 = arith.constant 0 : index
    %c0_19 = arith.constant 0 : index
    %22 = vector.load %arg5[%c0_17, %c0_18, %c0_19] : memref<2x16x128xbf16, #tpu.memory_space<vmem>>, vector<2x16x128xbf16>
    %cst_20 = arith.constant dense<0.000000e+00> : vector<2x16x128xf32>
    %23 = tpu.matmul %21, %22, %cst_20 {dimension_numbers = #tpu.dot_dimension_numbers<[2], [1], [1], [2], [0, 0, 0, 1, 1, 2], [0], [0]>} : vector<2x16x16xbf16>, vector<2x16x128xbf16>, vector<2x16x128xf32> -> vector<2x16x128xf32>
    %c0_21 = arith.constant 0 : index
    %c0_22 = arith.constant 0 : index
    %c0_23 = arith.constant 0 : index
    %24 = vector.load %arg10[%c0_21, %c0_22, %c0_23] : memref<2x16x128xf32, #tpu.memory_space<vmem>>, vector<2x16x128xf32>
    %25 = vector.broadcast %11 : vector<2x16x1xf32> to vector<2x16x128xf32>
    %26 = arith.mulf %25, %24 : vector<2x16x128xf32>
    %27 = arith.addf %26, %23 : vector<2x16x128xf32>
    %c0_24 = arith.constant 0 : index
    %c0_25 = arith.constant 0 : index
    %c0_26 = arith.constant 0 : index
    %28 = vector.load %arg10[%c0_24, %c0_25, %c0_26] : memref<2x16x128xf32, #tpu.memory_space<vmem>>, vector<2x16x128xf32>
    tpu.vector_store %arg10[%c0_24, %c0_25, %c0_26], %27 {strides = array<i32>} : memref<2x16x128xf32, #tpu.memory_space<vmem>>, vector<2x16x128xf32>,
    %c0_27 = arith.constant 0 : index
    %c0_28 = arith.constant 0 : index
    %c0_29 = arith.constant 0 : index
    %29 = vector.load %arg8[%c0_27, %c0_28, %c0_29] : memref<2x16x1xf32, #tpu.memory_space<vmem>>, vector<2x16x1xf32>
    tpu.vector_store %arg8[%c0_27, %c0_28, %c0_29], %9 {strides = array<i32>} : memref<2x16x1xf32, #tpu.memory_space<vmem>>, vector<2x16x1xf32>,
    %c0_i32_30 = arith.constant 0 : i32
    %30 = arith.cmpi eq, %arg2, %c0_i32_30 : i32
    %31 = arith.extui %30 : i1 to i32
    %c0_i32_31 = arith.constant 0 : i32
    %32 = arith.cmpi ne, %31, %c0_i32_31 : i32
    scf.if %32 {
      %c0_32 = arith.constant 0 : index
      %c0_33 = arith.constant 0 : index
      %c0_34 = arith.constant 0 : index
      %33 = vector.load %arg9[%c0_32, %c0_33, %c0_34] : memref<2x16x1xf32, #tpu.memory_space<vmem>>, vector<2x16x1xf32>
      %34 = tpu.reciprocal %33 : vector<2x16x1xf32> -> vector<2x16x1xf32>
      %c0_35 = arith.constant 0 : index
      %c0_36 = arith.constant 0 : index
      %c0_37 = arith.constant 0 : index
      %35 = vector.load %arg10[%c0_35, %c0_36, %c0_37] : memref<2x16x128xf32, #tpu.memory_space<vmem>>, vector<2x16x128xf32>
      %36 = vector.broadcast %34 : vector<2x16x1xf32> to vector<2x16x128xf32>
      %37 = arith.mulf %35, %36 : vector<2x16x128xf32>
      %c0_38 = arith.constant 0 : index
      %c0_39 = arith.constant 0 : index
      %c0_40 = arith.constant 0 : index
      %38 = vector.load %arg6[%c0_38, %c0_39, %c0_40] : memref<2x16x128xf32, #tpu.memory_space<vmem>>, vector<2x16x128xf32>
      tpu.vector_store %arg6[%c0_38, %c0_39, %c0_40], %37 {strides = array<i32>} : memref<2x16x128xf32, #tpu.memory_space<vmem>>, vector<2x16x128xf32>,
    } else {
    }
    return
  }
  func.func @transform_0(%arg0: i32, %arg1: i32, %arg2: i32) -> (i32, i32, i32) {
    %c0_i32 = arith.constant 0 : i32
    %c0_i32_0 = arith.constant 0 : i32
    return %arg0, %arg1, %c0_i32 : i32, i32, i32
  }
  func.func @transform_1(%arg0: i32, %arg1: i32, %arg2: i32) -> (i32, i32, i32) {
    %c0_i32 = arith.constant 0 : i32
    %c0_i32_0 = arith.constant 0 : i32
    return %arg0, %arg2, %c0_i32 : i32, i32, i32
  }
  func.func @transform_2(%arg0: i32, %arg1: i32, %arg2: i32) -> (i32, i32, i32) {
    %c0_i32 = arith.constant 0 : i32
    %c0_i32_0 = arith.constant 0 : i32
    return %arg0, %arg2, %c0_i32 : i32, i32, i32
  }
  func.func @transform_3(%arg0: i32, %arg1: i32, %arg2: i32) -> (i32, i32, i32) {
    %c0_i32 = arith.constant 0 : i32
    %c0_i32_0 = arith.constant 0 : i32
    return %arg0, %arg1, %c0_i32 : i32, i32, i32
  }
}

</mosaic_0001>

<llo_original>
// kernel: tpu_custom_call.1
$region0: #{tpu_custom_call.1}
  #allocation0 [shape = 'u32[]', space=smem, size = 0x4, offset = 0x4, fixed_abs, tag = 'smem constant byte address 0x4 - core index']
  #allocation1 [shape = 'u32[144,128]{1,0:T(1,128)}', space=vmem, size = 0x12000, scoped, tag = 'internal scratch']
  #allocation2 [shape = 'bf16[2,16,128]{2,1,0:T(8,128)(2,1)}', space=vmem, size = 0x2000, scoped, tag = 'scratch operand']
  #allocation3 [shape = 'f32[2,16,1]{2,1,0:T(8,128)}', space=vmem, size = 0x4000, scoped, tag = 'scratch operand']
  #allocation4 [shape = 'f32[2,16,1]{2,1,0:T(8,128)}', space=vmem, size = 0x4000, scoped, tag = 'scratch operand']
  #allocation5 [shape = 'f32[2,16,128]{2,1,0:T(8,128)}', space=vmem, size = 0x4000, scoped, tag = 'scratch operand']
  %s0 = inlined_call_operand.hbm [shape: bf16[4,16,128], index: 0, kind: input, shape index: {}]
  %s1 = inlined_call_operand.hbm [shape: bf16[4,16,128], index: 1, kind: input, shape index: {}]
  %s2 = inlined_call_operand.hbm [shape: bf16[4,16,128], index: 2, kind: input, shape index: {}]
  %s3 = inlined_call_operand.hbm [shape: f32[4,16,128], index: 3, kind: output, shape index: {}]
  %s4 = sld [smem:[#allocation0]]
  $region65: #{tpu_custom_call.1} parent=0
    _
  %s6 = ssub.s32 1, %s4
  %s7 = scalar_select 0, %s6, %s4
  $region1: #{tpu_custom_call.1} parent=0
    #allocation6 [shape = 'u8[16384]{0}', space=vmem, size = 0x4000, scoped, tag = 'input window, operand 0']
    #allocation7 [shape = 's32[2]{0}', space=sflag, size = 0x8, scoped, tag = 'scoped memory for tpu_custom_call.1']
    #allocation8 [shape = 's32[2]{0}', space=sflag, size = 0x8, scoped, tag = 'scoped memory for tpu_custom_call.1']
    #allocation9 [shape = 'u8[16384]{0}', space=vmem, size = 0x4000, scoped, tag = 'input window, operand 1']
    #allocation10 [shape = 's32[2]{0}', space=sflag, size = 0x8, scoped, tag = 'scoped memory for tpu_custom_call.1']
    #allocation11 [shape = 'u8[16384]{0}', space=vmem, size = 0x4000, scoped, tag = 'input window, operand 2']
    #allocation12 [shape = 'u8[32768]{0}', space=vmem, size = 0x8000, scoped, tag = 'output window, operand 0']
    %8 = vsyncpa [#allocation7], 0
    %s9 = scalar_lea.sflag [#allocation7], 1
    %10 = vsyncpa %s9, 0
    %11 = vsyncpa [#allocation10], 0
    %s12 = scalar_lea.sflag [#allocation10], 1
    %13 = vsyncpa %s12, 0
    %14 = vsyncpa [#allocation8], 0
    %s15 = scalar_lea.sflag [#allocation8], 1
    %16 = vsyncpa %s15, 0
    loop: start=0, step=1, limit=4
    $region2: #{tpu_custom_call.1} parent=1 // loop_pre_header
      _
    $region3: #{tpu_custom_call.1} parent=1 // loop_header
      %s18 = sphi 0, %s22
      %p19 = scmp.ge.s32.totalorder %s18, 4
      %s25 = sphi 0, %s44
      %s26 = sphi 0, %s40
      %s27 = sphi 0, %s36
      %s28 = sphi 0, %s25
      %s29 = sphi 0, %s26
      %s30 = sphi 0, %s27
      %s31 = sphi 0, %s28
      %s32 = sphi 0, %s29
      %s33 = sphi 0, %s30
      %s49 = sphi 0, %s51
      %s52 = sphi 0, %s49
      %s53 = sphi 0, %s52
      %s69 = sphi 0, %s53
      %s77 = sphi 0, %s79
      %s80 = sphi 0, %s77
      %s81 = sphi 0, %s80
      %s97 = sphi 0, %s81
      %s105 = sphi 0, %s107
      %s108 = sphi 0, %s105
      %s109 = sphi 0, %s108
      %s125 = sphi 0, %s109
      %s133 = sphi 0, %s135
      %s136 = sphi 0, %s133
      %s137 = sphi 0, %s136
      %s153 = sphi 0, %s137
    $region4: #{tpu_custom_call.1} parent=1 // loop_header_branch
      %21 = sbr.rel (%p19) target = $region8
    $region5: #{tpu_custom_call.1} parent=1 // loop_body
      %s23 = ssub.s32 %s18, 1
      %s24 = ssub.s32 %s18, 2
      %s34 = sadd.s32 1, %s27
      %p35 = scmp.ge.s32.totalorder %s34, 1
      %s36 = scalar_select %p35, 0, %s34
      %s37 = sadd.s32 1, %s26
      %s38 = scalar_select %p35, %s37, %s26
      %p39 = scmp.ge.s32.totalorder %s38, 1
      %s40 = scalar_select %p39, 0, %s38
      %s41 = sadd.s32 1, %s25
      %s42 = scalar_select %p39, %s41, %s25
      %p43 = scmp.ge.s32.totalorder %s42, 2
      %s44 = scalar_select %p43, 0, %s42
      %s45 = ssub.s32 %s25, %s44
      %s46 = ssub.s32 %s26, %s40
      %s47 = sor.u32 %s45, %s46
      %p48 = scmp.eq.s32.totalorder %s47, 0
      %s50 = sadd.s32 %s49, 1
      %s51 = scalar_select %p48, %s49, %s50
      %p54 = pneg %p48
      %p55 = scmp.eq.s32.totalorder %s18, 1
      %p56 = por %p54, %p55
      %p57 = scmp.ne.s32.totalorder %s49, %s52
      %p58 = scmp.eq.s32.totalorder %s18, 0
      %p59 = por %p57, %p58
      %p60 = scmp.ne.s32.totalorder %s49, %s52
      %p61 = scmp.eq.s32.totalorder %s23, 1
      %p62 = por %p60, %p61
      %p63 = scmp.ne.s32.totalorder %s52, %s53
      %p64 = scmp.eq.s32.totalorder %s23, 0
      %p65 = por %p63, %p64
      %p66 = scmp.ne.s32.totalorder %s52, %s53
      %p67 = scmp.eq.s32.totalorder %s24, 1
      %p68 = por %p66, %p67
      %p70 = scmp.ne.s32.totalorder %s53, %s69
      %p71 = scmp.eq.s32.totalorder %s24, 0
      %p72 = por %p70, %p71
      %s73 = ssub.s32 %s25, %s44
      %s74 = ssub.s32 %s27, %s36
      %s75 = sor.u32 %s73, %s74
      %p76 = scmp.eq.s32.totalorder %s75, 0
      %s78 = sadd.s32 %s77, 1
      %s79 = scalar_select %p76, %s77, %s78
      %p82 = pneg %p76
      %p83 = scmp.eq.s32.totalorder %s18, 1
      %p84 = por %p82, %p83
      %p85 = scmp.ne.s32.totalorder %s77, %s80
      %p86 = scmp.eq.s32.totalorder %s18, 0
      %p87 = por %p85, %p86
      %p88 = scmp.ne.s32.totalorder %s77, %s80
      %p89 = scmp.eq.s32.totalorder %s23, 1
      %p90 = por %p88, %p89
      %p91 = scmp.ne.s32.totalorder %s80, %s81
      %p92 = scmp.eq.s32.totalorder %s23, 0
      %p93 = por %p91, %p92
      %p94 = scmp.ne.s32.totalorder %s80, %s81
      %p95 = scmp.eq.s32.totalorder %s24, 1
      %p96 = por %p94, %p95
      %p98 = scmp.ne.s32.totalorder %s81, %s97
      %p99 = scmp.eq.s32.totalorder %s24, 0
      %p100 = por %p98, %p99
      %s101 = ssub.s32 %s25, %s44
      %s102 = ssub.s32 %s27, %s36
      %s103 = sor.u32 %s101, %s102
      %p104 = scmp.eq.s32.totalorder %s103, 0
      %s106 = sadd.s32 %s105, 1
      %s107 = scalar_select %p104, %s105, %s106
      %p110 = pneg %p104
      %p111 = scmp.eq.s32.totalorder %s18, 1
      %p112 = por %p110, %p111
      %p113 = scmp.ne.s32.totalorder %s105, %s108
      %p114 = scmp.eq.s32.totalorder %s18, 0
      %p115 = por %p113, %p114
      %p116 = scmp.ne.s32.totalorder %s105, %s108
      %p117 = scmp.eq.s32.totalorder %s23, 1
      %p118 = por %p116, %p117
      %p119 = scmp.ne.s32.totalorder %s108, %s109
      %p120 = scmp.eq.s32.totalorder %s23, 0
      %p121 = por %p119, %p120
      %p122 = scmp.ne.s32.totalorder %s108, %s109
      %p123 = scmp.eq.s32.totalorder %s24, 1
      %p124 = por %p122, %p123
      %p126 = scmp.ne.s32.totalorder %s109, %s125
      %p127 = scmp.eq.s32.totalorder %s24, 0
      %p128 = por %p126, %p127
      %s129 = ssub.s32 %s25, %s44
      %s130 = ssub.s32 %s26, %s40
      %s131 = sor.u32 %s129, %s130
      %p132 = scmp.eq.s32.totalorder %s131, 0
      %s134 = sadd.s32 %s133, 1
      %s135 = scalar_select %p132, %s133, %s134
      %p138 = pneg %p132
      %p139 = scmp.eq.s32.totalorder %s18, 1
      %p140 = por %p138, %p139
      %p141 = scmp.ne.s32.totalorder %s133, %s136
      %p142 = scmp.eq.s32.totalorder %s18, 0
      %p143 = por %p141, %p142
      %p144 = scmp.ne.s32.totalorder %s133, %s136
      %p145 = scmp.eq.s32.totalorder %s23, 1
      %p146 = por %p144, %p145
      %p147 = scmp.ne.s32.totalorder %s136, %s137
      %p148 = scmp.eq.s32.totalorder %s23, 0
      %p149 = por %p147, %p148
      %p150 = scmp.ne.s32.totalorder %s136, %s137
      %p151 = scmp.eq.s32.totalorder %s24, 1
      %p152 = por %p150, %p151
      %p154 = scmp.ne.s32.totalorder %s137, %s153
      %p155 = scmp.eq.s32.totalorder %s24, 0
      %p156 = por %p154, %p155
      %p157 = scmp.le.s32.totalorder 1, %s18
      %p158 = scmp.lt.s32.totalorder %s18, 3
      %p159 = pnand %p157, %p158
      %p160 = pneg %p159
      // Predicated region
      $region9: #{tpu_custom_call.1} parent=5 // pred_check
        _
      $region10: #{tpu_custom_call.1} parent=5 // pred_check_branch
        %162 = sbr.rel (%p159) target = $region12
      $region11: #{tpu_custom_call.1} parent=5 // pred_region
        %s163 = ssub.s32 %s18, 1
      $region12: #{tpu_custom_call.1} parent=5 // pred_fallthru
        _
      %p164 = scmp.lt.s32.totalorder %s18, 2
      // Predicated region
      $region13: #{tpu_custom_call.1} parent=5 // pred_check
        %p165 = pneg %p164
      $region14: #{tpu_custom_call.1} parent=5 // pred_check_branch
        %167 = sbr.rel (%p165) target = $region16
      $region15: #{tpu_custom_call.1} parent=5 // pred_region
        // Predicated region
        $region17: #{tpu_custom_call.1} parent=15 // pred_check
          %p168 = pneg %p59
        $region18: #{tpu_custom_call.1} parent=15 // pred_check_branch
          %170 = sbr.rel (%p168) target = $region20
        $region19: #{tpu_custom_call.1} parent=15 // pred_region
          %s171 = sand.u32 %s49, 1
          %s172 = scalar_lea.sflag [#allocation7], %s171
          %s173 = sand.u32 %s49, 1
          %s174 = smul.addr %s173, 16
          %s175 = scalar_lea.vmem [#allocation6], %s174
          %s176 = smul.u32 2, %s25
          %s177 = smul.u32 2, %s26
          %s179 = ssub.s32 256, 256
          %180 = vsyncadd %s172, %s179
          %s181 = smul.addr %s176, 2
          %s182 = sadd.s32 %s177, %s181
          %s183 = smul.addr %s182, 64
          %s184 = scalar_lea.hbm %s0, %s183
          %s185 = sshll.u32 %s175, 4
          %s186 = int_to_ptr.vmem [resolvable:$true] %s185
          %191 = dma.hbm_to_vmem [thread:$0]  %s184, 256, %s186, %s172, 64, 64, 4
        $region20: #{tpu_custom_call.1} parent=15 // pred_fallthru
          _
        // Predicated region
        $region21: #{tpu_custom_call.1} parent=15 // pred_check
          %p192 = pneg %p87
        $region22: #{tpu_custom_call.1} parent=15 // pred_check_branch
          %194 = sbr.rel (%p192) target = $region24
        $region23: #{tpu_custom_call.1} parent=15 // pred_region
          %s195 = sand.u32 %s18, 1
          %s196 = scalar_lea.sflag [#allocation10], %s195
          %s197 = sand.u32 %s77, 1
          %s198 = smul.addr %s197, 16
          %s199 = scalar_lea.vmem [#allocation9], %s198
          %s200 = smul.u32 2, %s25
          %s201 = smul.u32 2, %s27
          %s203 = ssub.s32 256, 256
          %204 = vsyncadd %s196, %s203
          %s205 = smul.addr %s200, 2
          %s206 = sadd.s32 %s201, %s205
          %s207 = smul.addr %s206, 64
          %s208 = scalar_lea.hbm %s1, %s207
          %s209 = sshll.u32 %s199, 4
          %s210 = int_to_ptr.vmem [resolvable:$true] %s209
          %215 = dma.hbm_to_vmem [thread:$0]  %s208, 256, %s210, %s196, 64, 64, 4
        $region24: #{tpu_custom_call.1} parent=15 // pred_fallthru
          _
        // Predicated region
        $region25: #{tpu_custom_call.1} parent=15 // pred_check
          %p216 = pneg %p115
        $region26: #{tpu_custom_call.1} parent=15 // pred_check_branch
          %218 = sbr.rel (%p216) target = $region28
        $region27: #{tpu_custom_call.1} parent=15 // pred_region
          %s219 = sand.u32 %s18, 1
          %s220 = scalar_lea.sflag [#allocation10], %s219
          %s221 = sand.u32 %s105, 1
          %s222 = smul.addr %s221, 16
          %s223 = scalar_lea.vmem [#allocation11], %s222
          %s224 = smul.u32 2, %s25
          %s225 = smul.u32 2, %s27
          %s227 = ssub.s32 256, 256
          %228 = vsyncadd %s220, %s227
          %s229 = smul.addr %s224, 2
          %s230 = sadd.s32 %s225, %s229
          %s231 = smul.addr %s230, 64
          %s232 = scalar_lea.hbm %s2, %s231
          %s233 = sshll.u32 %s223, 4
          %s234 = int_to_ptr.vmem [resolvable:$true] %s233
          %239 = dma.hbm_to_vmem [thread:$0]  %s232, 256, %s234, %s220, 64, 64, 4
        $region28: #{tpu_custom_call.1} parent=15 // pred_fallthru
          _
      $region16: #{tpu_custom_call.1} parent=5 // pred_fallthru
        _
      %p240 = scmp.le.s32.totalorder 1, %s18
      %p241 = scmp.lt.s32.totalorder %s18, 3
      %p242 = pnand %p240, %p241
      %p243 = pneg %p242
      // Predicated region
      $region29: #{tpu_custom_call.1} parent=5 // pred_check
        _
      $region30: #{tpu_custom_call.1} parent=5 // pred_check_branch
        %245 = sbr.rel (%p242) target = $region32
      $region31: #{tpu_custom_call.1} parent=5 // pred_region
        %s246 = ssub.s32 %s18, 1
        %s247 = sand.u32 %s52, 1
        %s248 = scalar_lea.sflag [#allocation7], %s247
        %s249 = sand.u32 %s52, 1
        %s250 = smul.addr %s249, 16
        %s251 = scalar_lea.vmem [#allocation6], %s250
        // Predicated region
        $region33: #{tpu_custom_call.1} parent=31 // pred_check
          %p252 = pneg %p65
        $region34: #{tpu_custom_call.1} parent=31 // pred_check_branch
          %254 = sbr.rel (%p252) target = $region36
        $region35: #{tpu_custom_call.1} parent=31 // pred_region
          %255 = dma.done %s248, 256
        $region36: #{tpu_custom_call.1} parent=31 // pred_fallthru
          _
        %s256 = sand.u32 %s23, 1
        %s257 = scalar_lea.sflag [#allocation10], %s256
        %s258 = sand.u32 %s80, 1
        %s259 = smul.addr %s258, 16
        %s260 = scalar_lea.vmem [#allocation9], %s259
        // Predicated region
        $region37: #{tpu_custom_call.1} parent=31 // pred_check
          %p261 = pneg %p93
        $region38: #{tpu_custom_call.1} parent=31 // pred_check_branch
          %263 = sbr.rel (%p261) target = $region40
        $region39: #{tpu_custom_call.1} parent=31 // pred_region
          %264 = dma.done %s257, 256
        $region40: #{tpu_custom_call.1} parent=31 // pred_fallthru
          _
        %s265 = sand.u32 %s23, 1
        %s266 = scalar_lea.sflag [#allocation10], %s265
        %s267 = sand.u32 %s108, 1
        %s268 = smul.addr %s267, 16
        %s269 = scalar_lea.vmem [#allocation11], %s268
        // Predicated region
        $region41: #{tpu_custom_call.1} parent=31 // pred_check
          %p270 = pneg %p121
        $region42: #{tpu_custom_call.1} parent=31 // pred_check_branch
          %272 = sbr.rel (%p270) target = $region44
        $region43: #{tpu_custom_call.1} parent=31 // pred_region
          %273 = dma.done %s266, 256
        $region44: #{tpu_custom_call.1} parent=31 // pred_fallthru
          _
        %s274 = sand.u32 %s52, 1
        %s275 = scalar_lea.sflag [#allocation7], %s274
        %s276 = sand.u32 %s52, 1
        %s277 = smul.addr %s276, 16
        %s278 = scalar_lea.vmem [#allocation6], %s277
        %p279 = pneg %p65
        %p280 = pneg %p62
        %s281 = sand.u32 %s23, 1
        %s282 = scalar_lea.sflag [#allocation10], %s281
        %s283 = sand.u32 %s80, 1
        %s284 = smul.addr %s283, 16
        %s285 = scalar_lea.vmem [#allocation9], %s284
        %p286 = pneg %p93
        %p287 = pneg %p90
        %s288 = sand.u32 %s23, 1
        %s289 = scalar_lea.sflag [#allocation10], %s288
        %s290 = sand.u32 %s108, 1
        %s291 = smul.addr %s290, 16
        %s292 = scalar_lea.vmem [#allocation11], %s291
        %p293 = pneg %p121
        %p294 = pneg %p118
        %p295 = pneg %p149
        %p296 = pneg %p146
        %s297 = sand.u32 %s136, 1
        %s298 = scalar_lea.sflag [#allocation8], %s297
        %s299 = sand.u32 %s136, 1
        %s300 = smul.addr %s299, 32
        %s301 = scalar_lea.vmem [#allocation12], %s300
        %s302 = smul.u32 2, %s28
        %s303 = smul.u32 2, %s29
        %s304 = smul.u32 2, %s28
        %s305 = smul.u32 2, %s30
        %s306 = smul.u32 2, %s28
        %s307 = smul.u32 2, %s30
        %s308 = smul.u32 2, %s28
        %s309 = smul.u32 2, %s29
        %p311 = scmp.eq.s32.totalorder %s30, 0
        // Predicated region
        $region45: #{tpu_custom_call.1} parent=31 // pred_check
          %p312 = pneg %p311
        $region46: #{tpu_custom_call.1} parent=31 // pred_check_branch
          %314 = sbr.rel (%p312) target = $region48
        $region47: #{tpu_custom_call.1} parent=31 // pred_region
          %v315 = vld [vmem:[%s251] sm:$0xf]
          %v316 = vld [vmem:[%s251 + $0x4] sm:$0xf]
          %v317 = vld [vmem:[%s251 + $0x8] sm:$0xf]
          %v318 = vld [vmem:[%s251 + $0xc] sm:$0xf]
          %v319 = vunpack.c.l.bf16 %v315
          %v320 = vunpack.c.l.bf16 %v316
          %v321 = vunpack.c.l.bf16 %v317
          %v322 = vunpack.c.l.bf16 %v318
          %v323 = vmul.f32 %v319, 0.088388346
          %v324 = vmul.f32 %v320, 0.088388346
          %v325 = vmul.f32 %v321, 0.088388346
          %v326 = vmul.f32 %v322, 0.088388346
          %v327 = vpack.c.bf16 %v324, %v323
          %v328 = vpack.c.bf16 %v326, %v325
          %v331 = vunpack.c.l.b16 %v327
          %v332 = vunpack.c.h.b16 %v327
          %v333 = vunpack.c.l.b16 %v328
          %v334 = vunpack.c.h.b16 %v328
          %v335 = vpack.c.b16 %v331, %v331
          %v336 = vpack.c.b16 %v332, %v332
          %v337 = vpack.c.b16 %v333, %v333
          %v338 = vpack.c.b16 %v334, %v334
          %343 = vst [vmem:[#allocation2] sm:$0xf] %v335
          %344 = vst [vmem:[#allocation2 + $0x4] sm:$0xf] %v336
          %345 = vst [vmem:[#allocation2 + $0x8] sm:$0xf] %v337
          %346 = vst [vmem:[#allocation2 + $0xc] sm:$0xf] %v338
          %vm347 = vcmask 7168
          %348 = vst.msk [vmem:[#allocation3] sm:$0xff] %vm347, -inf
          %349 = vst.msk [vmem:[#allocation3 + $0x8] sm:$0xff] %vm347, -inf
          %350 = vst.msk [vmem:[#allocation3 + $0x10] sm:$0xff] %vm347, -inf
          %351 = vst.msk [vmem:[#allocation3 + $0x18] sm:$0xff] %vm347, -inf
          %352 = vst.msk [vmem:[#allocation4] sm:$0xff] %vm347, 0.0
          %353 = vst.msk [vmem:[#allocation4 + $0x8] sm:$0xff] %vm347, 0.0
          %354 = vst.msk [vmem:[#allocation4 + $0x10] sm:$0xff] %vm347, 0.0
          %355 = vst.msk [vmem:[#allocation4 + $0x18] sm:$0xff] %vm347, 0.0
          %356 = vst [vmem:[#allocation5] sm:$0xff] 0.0
          %357 = vst [vmem:[#allocation5 + $0x8] sm:$0xff] 0.0
          %358 = vst [vmem:[#allocation5 + $0x10] sm:$0xff] 0.0
          %359 = vst [vmem:[#allocation5 + $0x18] sm:$0xff] 0.0
        $region48: #{tpu_custom_call.1} parent=31 // pred_fallthru
          _
        %v360 = vld [vmem:[%s260] sm:$0xf]
        %v361 = vld [vmem:[%s260 + $0x4] sm:$0xf]
        %v362 = vld [vmem:[%s260 + $0x8] sm:$0xf]
        %v363 = vld [vmem:[%s260 + $0xc] sm:$0xf]
        %v364 = vld [vmem:[#allocation2] sm:$0xf]
        %v365 = vld [vmem:[#allocation2 + $0x4] sm:$0xf]
        %v366 = vld [vmem:[#allocation2 + $0x8] sm:$0xf]
        %v367 = vld [vmem:[#allocation2 + $0xc] sm:$0xf]
        %v370 = vunpack.c.l.b16 %v364
        %v371 = vunpack.c.l.b16 %v365
        %v372 = vpack.c.b16 %v371, %v370
        %v376 = vunpack.c.l.b16 %v360
        %v377 = vunpack.c.l.b16 %v361
        %v378 = vpack.c.b16 %v377, %v376
        %380 = vmatprep.subr.bf16.mxu0 0
        %381 = vmatpush1.bf16.xpose.msra.mxu0 0
        %382 = vmatprep.subr.bf16.mxu0 0
        %383 = vmatpush1.bf16.xpose.msra.mxu0 0
        %384 = vmatprep.subr.bf16.mxu0 0
        %385 = vmatpush1.bf16.xpose.msra.mxu0 0
        %386 = vmatprep.subr.bf16.mxu0 0
        %387 = vmatpush1.bf16.xpose.msra.mxu0 0
        %388 = vmatprep.subr.bf16.mxu0 0
        %389 = vmatpush1.bf16.xpose.msra.mxu0 0
        %390 = vmatprep.subr.bf16.mxu0 0
        %391 = vmatpush1.bf16.xpose.msra.mxu0 0
        %392 = vmatprep.subr.bf16.mxu0 0
        %393 = vmatpush1.bf16.xpose.msra.mxu0 0
        %394 = vmatprep.subr.bf16.mxu0 0
        %395 = vmatpush1.bf16.xpose.msra.mxu0 %v378
        %396 = vmatprep.subr.bf16.mxu0 0
        %397 = vmatpush2.bf16.xpose.msra.mxu0 0
        %398 = vmatprep.subr.bf16.mxu0 0
        %399 = vmatpush2.bf16.xpose.msra.mxu0 0
        %400 = vmatprep.subr.bf16.mxu0 0
        %401 = vmatpush2.bf16.xpose.msra.mxu0 0
        %402 = vmatprep.subr.bf16.mxu0 0
        %403 = vmatpush2.bf16.xpose.msra.mxu0 0
        %404 = vmatprep.subr.bf16.mxu0 0
        %405 = vmatpush2.bf16.xpose.msra.mxu0 0
        %406 = vmatprep.subr.bf16.mxu0 0
        %407 = vmatpush2.bf16.xpose.msra.mxu0 0
        %408 = vmatprep.subr.bf16.mxu0 0
        %409 = vmatpush2.bf16.xpose.msra.mxu0 0
        %410 = vmatprep.subr.bf16.mxu0 0
        %411 = vmatpush2.bf16.xpose.msra.mxu0 0
        %412 = vmatprep.mubr.bf16.mxu0 0
        %413 = vmatmul.mubr.bf16.gmra.mxu0 %v372
        %v414 = vpop.f32.mrf.mxu0
        %v415 = vadd.f32 0.0, %v414
        %v416 = vpop.f32.mrf.mxu0
        %v417 = vpop.f32.mrf.mxu0
        %v418 = vadd.f32 0.0, %v417
        %v419 = vpop.f32.mrf.mxu0
        %420 = vdwg.mxu0
        %v423 = vunpack.c.l.b16 %v366
        %v424 = vunpack.c.l.b16 %v367
        %v425 = vpack.c.b16 %v424, %v423
        %v429 = vunpack.c.l.b16 %v362
        %v430 = vunpack.c.l.b16 %v363
        %v431 = vpack.c.b16 %v430, %v429
        %433 = vmatprep.subr.bf16.mxu0 0
        %434 = vmatpush1.bf16.xpose.msra.mxu0 0
        %435 = vmatprep.subr.bf16.mxu0 0
        %436 = vmatpush1.bf16.xpose.msra.mxu0 0
        %437 = vmatprep.subr.bf16.mxu0 0
        %438 = vmatpush1.bf16.xpose.msra.mxu0 0
        %439 = vmatprep.subr.bf16.mxu0 0
        %440 = vmatpush1.bf16.xpose.msra.mxu0 0
        %441 = vmatprep.subr.bf16.mxu0 0
        %442 = vmatpush1.bf16.xpose.msra.mxu0 0
        %443 = vmatprep.subr.bf16.mxu0 0
        %444 = vmatpush1.bf16.xpose.msra.mxu0 0
        %445 = vmatprep.subr.bf16.mxu0 0
        %446 = vmatpush1.bf16.xpose.msra.mxu0 0
        %447 = vmatprep.subr.bf16.mxu0 0
        %448 = vmatpush1.bf16.xpose.msra.mxu0 %v431
        %449 = vmatprep.subr.bf16.mxu0 0
        %450 = vmatpush2.bf16.xpose.msra.mxu0 0
        %451 = vmatprep.subr.bf16.mxu0 0
        %452 = vmatpush2.bf16.xpose.msra.mxu0 0
        %453 = vmatprep.subr.bf16.mxu0 0
        %454 = vmatpush2.bf16.xpose.msra.mxu0 0
        %455 = vmatprep.subr.bf16.mxu0 0
        %456 = vmatpush2.bf16.xpose.msra.mxu0 0
        %457 = vmatprep.subr.bf16.mxu0 0
        %458 = vmatpush2.bf16.xpose.msra.mxu0 0
        %459 = vmatprep.subr.bf16.mxu0 0
        %460 = vmatpush2.bf16.xpose.msra.mxu0 0
        %461 = vmatprep.subr.bf16.mxu0 0
        %462 = vmatpush2.bf16.xpose.msra.mxu0 0
        %463 = vmatprep.subr.bf16.mxu0 0
        %464 = vmatpush2.bf16.xpose.msra.mxu0 0
        %465 = vmatprep.mubr.bf16.mxu0 0
        %466 = vmatmul.mubr.bf16.gmra.mxu0 %v425
        %v467 = vpop.f32.mrf.mxu0
        %v468 = vadd.f32 0.0, %v467
        %v469 = vpop.f32.mrf.mxu0
        %v470 = vpop.f32.mrf.mxu0
        %v471 = vadd.f32 0.0, %v470
        %v472 = vpop.f32.mrf.mxu0
        %473 = vdwg.mxu0
        %v474 = vld [vmem:[#allocation3] sm:$0xff]
        %v475 = vld [vmem:[#allocation3 + $0x8] sm:$0xff]
        %v476 = vld [vmem:[#allocation3 + $0x10] sm:$0xff]
        %v477 = vld [vmem:[#allocation3 + $0x18] sm:$0xff]
        %vm478 = vcmask 130048
        %v479 = vsel %vm478, %v415, -inf
        %480 = vmax.xlane.f32.xlu0 %v479
        %v481 = vpop.xlane.xlu0 %480
        %v482 = vsel %vm478, %v418, -inf
        %483 = vmax.xlane.f32.xlu0 %v482
        %v484 = vpop.xlane.xlu0 %483
        %v485 = vsel %vm478, %v468, -inf
        %486 = vmax.xlane.f32.xlu0 %v485
        %v487 = vpop.xlane.xlu0 %486
        %v488 = vsel %vm478, %v471, -inf
        %489 = vmax.xlane.f32.xlu0 %v488
        %v490 = vpop.xlane.xlu0 %489
        %v491 = vmax.f32 %v474, %v481
        %v492 = vmax.f32 %v475, %v484
        %v493 = vmax.f32 %v476, %v487
        %v494 = vmax.f32 %v477, %v490
        %v495 = vsub.f32 %v474, %v491
        %v496 = vsub.f32 %v475, %v492
        %v497 = vsub.f32 %v476, %v493
        %v498 = vsub.f32 %v477, %v494
        %v499 = vmul.f32 %v495, 1.442695
        %v500 = vpow.pop %v499
        %v501 = vmul.f32 %v496, 1.442695
        %v502 = vpow.pop %v501
        %v503 = vmul.f32 %v497, 1.442695
        %v504 = vpow.pop %v503
        %v505 = vmul.f32 %v498, 1.442695
        %v506 = vpow.pop %v505
        %508 = vset.pattern.permute.xlu0 0
        %509 = vperm.xlu0 %508, %v491
        %v510 = vpop.permute.xlu0 %509
        %513 = vset.pattern.permute.xlu0 0
        %514 = vperm.xlu0 %513, %v492
        %v515 = vpop.permute.xlu0 %514
        %518 = vset.pattern.permute.xlu0 0
        %519 = vperm.xlu0 %518, %v493
        %v520 = vpop.permute.xlu0 %519
        %523 = vset.pattern.permute.xlu0 0
        %524 = vperm.xlu0 %523, %v494
        %v525 = vpop.permute.xlu0 %524
        %v527 = vsub.f32 %v415, %v510
        %v528 = vsub.f32 %v418, %v515
        %v529 = vsub.f32 %v468, %v520
        %v530 = vsub.f32 %v471, %v525
        %v531 = vmul.f32 %v527, 1.442695
        %v532 = vpow.pop %v531
        %v533 = vmul.f32 %v528, 1.442695
        %v534 = vpow.pop %v533
        %v535 = vmul.f32 %v529, 1.442695
        %v536 = vpow.pop %v535
        %v537 = vmul.f32 %v530, 1.442695
        %v538 = vpow.pop %v537
        %v539 = vld [vmem:[#allocation4] sm:$0xff]
        %v540 = vld [vmem:[#allocation4 + $0x8] sm:$0xff]
        %v541 = vld [vmem:[#allocation4 + $0x10] sm:$0xff]
        %v542 = vld [vmem:[#allocation4 + $0x18] sm:$0xff]
        %v543 = vmul.f32 %v500, %v539
        %v544 = vmul.f32 %v502, %v540
        %v545 = vmul.f32 %v504, %v541
        %v546 = vmul.f32 %v506, %v542
        %v547 = vsel %vm478, %v532, 0.0
        %548 = vadd.xlane.f32.xlu0 %v547
        %v549 = vpop.xlane.xlu0 %548
        %v550 = vsel %vm478, %v534, 0.0
        %551 = vadd.xlane.f32.xlu0 %v550
        %v552 = vpop.xlane.xlu0 %551
        %v553 = vsel %vm478, %v536, 0.0
        %554 = vadd.xlane.f32.xlu0 %v553
        %v555 = vpop.xlane.xlu0 %554
        %v556 = vsel %vm478, %v538, 0.0
        %557 = vadd.xlane.f32.xlu0 %v556
        %v558 = vpop.xlane.xlu0 %557
        %v559 = vadd.f32 %v543, %v549
        %v560 = vadd.f32 %v544, %v552
        %v561 = vadd.f32 %v545, %v555
        %v562 = vadd.f32 %v546, %v558
        %vm563 = vcmask 7168
        %564 = vst.msk [vmem:[#allocation4] sm:$0xff] %vm563, %v559
        %565 = vst.msk [vmem:[#allocation4 + $0x8] sm:$0xff] %vm563, %v560
        %566 = vst.msk [vmem:[#allocation4 + $0x10] sm:$0xff] %vm563, %v561
        %567 = vst.msk [vmem:[#allocation4 + $0x18] sm:$0xff] %vm563, %v562
        %v568 = vpack.c.bf16 %v534, %v532
        %v569 = vpack.c.bf16 %v538, %v536
        %v570 = vld [vmem:[%s269] sm:$0xf]
        %v571 = vld [vmem:[%s269 + $0x4] sm:$0xf]
        %v572 = vld [vmem:[%s269 + $0x8] sm:$0xf]
        %v573 = vld [vmem:[%s269 + $0xc] sm:$0xf]
        %v576 = vunpack.c.l.b16 %v570
        %v577 = vunpack.c.l.b16 %v571
        %v578 = vpack.c.b16 %v577, %v576
        %v581 = vsel %vm478, %v568, 0
        %583 = vmatprep.subr.bf16.mxu0 0
        %584 = vmatpush1.bf16.msra.mxu0 0
        %585 = vmatprep.subr.bf16.mxu0 0
        %586 = vmatpush1.bf16.msra.mxu0 0
        %587 = vmatprep.subr.bf16.mxu0 0
        %588 = vmatpush1.bf16.msra.mxu0 0
        %589 = vmatprep.subr.bf16.mxu0 0
        %590 = vmatpush1.bf16.msra.mxu0 0
        %591 = vmatprep.subr.bf16.mxu0 0
        %592 = vmatpush1.bf16.msra.mxu0 0
        %593 = vmatprep.subr.bf16.mxu0 0
        %594 = vmatpush1.bf16.msra.mxu0 0
        %595 = vmatprep.subr.bf16.mxu0 0
        %596 = vmatpush1.bf16.msra.mxu0 0
        %597 = vmatprep.subr.bf16.mxu0 0
        %598 = vmatpush1.bf16.msra.mxu0 %v578
        %599 = vmatprep.subr.bf16.mxu0 0
        %600 = vmatpush2.bf16.msra.mxu0 0
        %601 = vmatprep.subr.bf16.mxu0 0
        %602 = vmatpush2.bf16.msra.mxu0 0
        %603 = vmatprep.subr.bf16.mxu0 0
        %604 = vmatpush2.bf16.msra.mxu0 0
        %605 = vmatprep.subr.bf16.mxu0 0
        %606 = vmatpush2.bf16.msra.mxu0 0
        %607 = vmatprep.subr.bf16.mxu0 0
        %608 = vmatpush2.bf16.msra.mxu0 0
        %609 = vmatprep.subr.bf16.mxu0 0
        %610 = vmatpush2.bf16.msra.mxu0 0
        %611 = vmatprep.subr.bf16.mxu0 0
        %612 = vmatpush2.bf16.msra.mxu0 0
        %613 = vmatprep.subr.bf16.mxu0 0
        %614 = vmatpush2.bf16.msra.mxu0 0
        %615 = vmatprep.mubr.bf16.mxu0 0
        %616 = vmatmul.mubr.bf16.gmra.mxu0 %v581
        %v617 = vpop.f32.mrf.mxu0
        %v618 = vadd.f32 0.0, %v617
        %v619 = vpop.f32.mrf.mxu0
        %v620 = vpop.f32.mrf.mxu0
        %v621 = vadd.f32 0.0, %v620
        %v622 = vpop.f32.mrf.mxu0
        %623 = vdwg.mxu0
        %v626 = vunpack.c.l.b16 %v572
        %v627 = vunpack.c.l.b16 %v573
        %v628 = vpack.c.b16 %v627, %v626
        %v631 = vsel %vm478, %v569, 0
        %633 = vmatprep.subr.bf16.mxu0 0
        %634 = vmatpush1.bf16.msra.mxu0 0
        %635 = vmatprep.subr.bf16.mxu0 0
        %636 = vmatpush1.bf16.msra.mxu0 0
        %637 = vmatprep.subr.bf16.mxu0 0
        %638 = vmatpush1.bf16.msra.mxu0 0
        %639 = vmatprep.subr.bf16.mxu0 0
        %640 = vmatpush1.bf16.msra.mxu0 0
        %641 = vmatprep.subr.bf16.mxu0 0
        %642 = vmatpush1.bf16.msra.mxu0 0
        %643 = vmatprep.subr.bf16.mxu0 0
        %644 = vmatpush1.bf16.msra.mxu0 0
        %645 = vmatprep.subr.bf16.mxu0 0
        %646 = vmatpush1.bf16.msra.mxu0 0
        %647 = vmatprep.subr.bf16.mxu0 0
        %648 = vmatpush1.bf16.msra.mxu0 %v628
        %649 = vmatprep.subr.bf16.mxu0 0
        %650 = vmatpush2.bf16.msra.mxu0 0
        %651 = vmatprep.subr.bf16.mxu0 0
        %652 = vmatpush2.bf16.msra.mxu0 0
        %653 = vmatprep.subr.bf16.mxu0 0
        %654 = vmatpush2.bf16.msra.mxu0 0
        %655 = vmatprep.subr.bf16.mxu0 0
        %656 = vmatpush2.bf16.msra.mxu0 0
        %657 = vmatprep.subr.bf16.mxu0 0
        %658 = vmatpush2.bf16.msra.mxu0 0
        %659 = vmatprep.subr.bf16.mxu0 0
        %660 = vmatpush2.bf16.msra.mxu0 0
        %661 = vmatprep.subr.bf16.mxu0 0
        %662 = vmatpush2.bf16.msra.mxu0 0
        %663 = vmatprep.subr.bf16.mxu0 0
        %664 = vmatpush2.bf16.msra.mxu0 0
        %665 = vmatprep.mubr.bf16.mxu0 0
        %666 = vmatmul.mubr.bf16.gmra.mxu0 %v631
        %v667 = vpop.f32.mrf.mxu0
        %v668 = vadd.f32 0.0, %v667
        %v669 = vpop.f32.mrf.mxu0
        %v670 = vpop.f32.mrf.mxu0
        %v671 = vadd.f32 0.0, %v670
        %v672 = vpop.f32.mrf.mxu0
        %673 = vdwg.mxu0
        %v674 = vld [vmem:[#allocation5] sm:$0xff]
        %v675 = vld [vmem:[#allocation5 + $0x8] sm:$0xff]
        %v676 = vld [vmem:[#allocation5 + $0x10] sm:$0xff]
        %v677 = vld [vmem:[#allocation5 + $0x18] sm:$0xff]
        %679 = vset.pattern.permute.xlu0 0
        %680 = vperm.xlu0 %679, %v500
        %v681 = vpop.permute.xlu0 %680
        %684 = vset.pattern.permute.xlu0 0
        %685 = vperm.xlu0 %684, %v502
        %v686 = vpop.permute.xlu0 %685
        %689 = vset.pattern.permute.xlu0 0
        %690 = vperm.xlu0 %689, %v504
        %v691 = vpop.permute.xlu0 %690
        %694 = vset.pattern.permute.xlu0 0
        %695 = vperm.xlu0 %694, %v506
        %v696 = vpop.permute.xlu0 %695
        %v698 = vmul.f32 %v681, %v674
        %v699 = vmul.f32 %v686, %v675
        %v700 = vmul.f32 %v691, %v676
        %v701 = vmul.f32 %v696, %v677
        %v702 = vadd.f32 %v698, %v618
        %v703 = vadd.f32 %v699, %v621
        %v704 = vadd.f32 %v700, %v668
        %v705 = vadd.f32 %v701, %v671
        %706 = vst [vmem:[#allocation5] sm:$0xff] %v702
        %707 = vst [vmem:[#allocation5 + $0x8] sm:$0xff] %v703
        %708 = vst [vmem:[#allocation5 + $0x10] sm:$0xff] %v704
        %709 = vst [vmem:[#allocation5 + $0x18] sm:$0xff] %v705
        %710 = vst.msk [vmem:[#allocation3] sm:$0xff] %vm563, %v491
        %711 = vst.msk [vmem:[#allocation3 + $0x8] sm:$0xff] %vm563, %v492
        %712 = vst.msk [vmem:[#allocation3 + $0x10] sm:$0xff] %vm563, %v493
        %713 = vst.msk [vmem:[#allocation3 + $0x18] sm:$0xff] %vm563, %v494
        // Predicated region
        $region49: #{tpu_custom_call.1} parent=31 // pred_check
          %p714 = pneg %p311
        $region50: #{tpu_custom_call.1} parent=31 // pred_check_branch
          %716 = sbr.rel (%p714) target = $region52
        $region51: #{tpu_custom_call.1} parent=31 // pred_region
          %v717 = vld [vmem:[#allocation4] sm:$0xff]
          %v718 = vld [vmem:[#allocation4 + $0x8] sm:$0xff]
          %v719 = vld [vmem:[#allocation4 + $0x10] sm:$0xff]
          %v720 = vld [vmem:[#allocation4 + $0x18] sm:$0xff]
          %v721 = vrcp.pop %v717
          %v722 = vrcp.pop %v718
          %v723 = vrcp.pop %v719
          %v724 = vrcp.pop %v720
          %v725 = vld [vmem:[#allocation5] sm:$0xff]
          %v726 = vld [vmem:[#allocation5 + $0x8] sm:$0xff]
          %v727 = vld [vmem:[#allocation5 + $0x10] sm:$0xff]
          %v728 = vld [vmem:[#allocation5 + $0x18] sm:$0xff]
          %730 = vset.pattern.permute.xlu0 0
          %731 = vperm.xlu0 %730, %v721
          %v732 = vpop.permute.xlu0 %731
          %735 = vset.pattern.permute.xlu0 0
          %736 = vperm.xlu0 %735, %v722
          %v737 = vpop.permute.xlu0 %736
          %740 = vset.pattern.permute.xlu0 0
          %741 = vperm.xlu0 %740, %v723
          %v742 = vpop.permute.xlu0 %741
          %745 = vset.pattern.permute.xlu0 0
          %746 = vperm.xlu0 %745, %v724
          %v747 = vpop.permute.xlu0 %746
          %v749 = vmul.f32 %v725, %v732
          %v750 = vmul.f32 %v726, %v737
          %v751 = vmul.f32 %v727, %v742
          %v752 = vmul.f32 %v728, %v747
          %753 = vst [vmem:[%s301] sm:$0xff] %v749
          %754 = vst [vmem:[%s301 + $0x8] sm:$0xff] %v750
          %755 = vst [vmem:[%s301 + $0x10] sm:$0xff] %v751
          %756 = vst [vmem:[%s301 + $0x18] sm:$0xff] %v752
        $region52: #{tpu_custom_call.1} parent=31 // pred_fallthru
          _
        %s757 = sand.u32 %s136, 1
        %s758 = scalar_lea.sflag [#allocation8], %s757
        %s759 = sand.u32 %s136, 1
        %s760 = smul.addr %s759, 32
        %s761 = scalar_lea.vmem [#allocation12], %s760
        // Predicated region
        $region53: #{tpu_custom_call.1} parent=31 // pred_check
          %p762 = pneg %p146
        $region54: #{tpu_custom_call.1} parent=31 // pred_check_branch
          %764 = sbr.rel (%p762) target = $region56
        $region55: #{tpu_custom_call.1} parent=31 // pred_region
          %s765 = smul.u32 2, %s28
          %s766 = smul.u32 2, %s29
          %s768 = ssub.s32 512, 512
          %769 = vsyncadd %s758, %s768
          %s770 = smul.addr %s765, 2
          %s771 = sadd.s32 %s766, %s770
          %s772 = smul.addr %s771, 128
          %s773 = scalar_lea.hbm %s3, %s772
          %s774 = sshll.u32 %s761, 4
          %s775 = int_to_ptr.vmem [resolvable:$true] %s774
          %780 = dma.vmem_to_hbm [thread:$0]  %s775, 512, %s773, %s758, 128, 128, 8
        $region56: #{tpu_custom_call.1} parent=31 // pred_fallthru
          _
      $region32: #{tpu_custom_call.1} parent=5 // pred_fallthru
        _
      %p781 = scmp.le.s32.totalorder 2, %s18
      // Predicated region
      $region57: #{tpu_custom_call.1} parent=5 // pred_check
        %p782 = pneg %p781
      $region58: #{tpu_custom_call.1} parent=5 // pred_check_branch
        %784 = sbr.rel (%p782) target = $region60
      $region59: #{tpu_custom_call.1} parent=5 // pred_region
        %s785 = ssub.s32 %s18, 2
        // Predicated region
        $region61: #{tpu_custom_call.1} parent=59 // pred_check
          %p786 = pneg %p152
        $region62: #{tpu_custom_call.1} parent=59 // pred_check_branch
          %788 = sbr.rel (%p786) target = $region64
        $region63: #{tpu_custom_call.1} parent=59 // pred_region
          %s789 = sand.u32 %s137, 1
          %s790 = scalar_lea.sflag [#allocation8], %s789
          %s791 = sand.u32 %s137, 1
          %s792 = smul.addr %s791, 32
          %s793 = scalar_lea.vmem [#allocation12], %s792
          %794 = dma.done %s790, 512
        $region64: #{tpu_custom_call.1} parent=59 // pred_fallthru
          _
      $region60: #{tpu_custom_call.1} parent=5 // pred_fallthru
        _
    $region6: #{tpu_custom_call.1} parent=1 // loop_footer
      %s22 = sadd.s32 1, %s18
    $region7: #{tpu_custom_call.1} parent=1 // loop_footer_branch
      %17 = sbr.rel target = $region3
    $region8: #{tpu_custom_call.1} parent=1 // loop_exit
      _
    %795 = vsyncpa [#allocation7], 1
    %s796 = scalar_lea.sflag [#allocation7], 1
    %797 = vsyncpa %s796, 1
    %798 = vsyncpa [#allocation10], 1
    %s799 = scalar_lea.sflag [#allocation10], 1
    %800 = vsyncpa %s799, 1
    %801 = vsyncpa [#allocation8], 1
    %s802 = scalar_lea.sflag [#allocation8], 1
    %803 = vsyncpa %s802, 1

</llo_original>
